<compile_context>
chip_gen: v7x
topology: tpu7x:2x2x1
jax: 0.10.0
libtpu: 0.0.40
codegen_flags: <defaults>
</compile_context>

<pallas_src>
import jax
import jax.numpy as jnp
from jax.experimental import pallas as pl
from jax.experimental.pallas import tpu as pltpu

REPEATS = 4               # torch.cat((v, v, v, v), dim=1)
LANE = 128                # vreg lane width
MAX_BLOCK_ROWS = 4096     # (4096, 128) f32 = 2 MiB per tile
MIN_GRID = 4              # keep >= 4 grid steps when possible (v7x: 2 TCs)
PALLAS_MIN_ELEMS = 1 << 20  # below this, plain XLA wins (fixed-cost bound)


def _round_up(a, m):
    return -(-a // m) * m


def _relu_sq_plus_sq(x):
    # relu(x)^2 + x^2  ==  2*x^2 if x > 0 else x^2   (bit-identical in f32)
    x2 = x * x
    return jnp.where(x > 0, x2 + x2, x2)


def _relu_sq_plus_sq_kernel(x_ref, o_ref):
    o_ref[...] = _relu_sq_plus_sq(x_ref[...])


def _repeat4_flat(val, n):
    # cat((v,v,v,v), dim=1).view(-1) for C == 1 == repeat each value 4x
    # consecutively; single fused XLA broadcast/reshape (read N, write 4N).
    return jnp.broadcast_to(val[:, None], (n, REPEATS)).reshape(-1)


def model_forward(x, *, force_pallas=False):
    """x: (N, 1) -> flattened (N * REPEATS,) result, matching
    relu -> cat(dim=1, x4) -> v*v + x*x -> view(-1) for the C == 1 case."""
    N, C = x.shape
    assert C == 1, "PyTorch broadcasting in this module only works for C == 1"
    dtype = x.dtype
    flat = x.reshape(-1)

    # Small/medium fast path: one fused XLA pass beats kernel fixed costs.
    if not force_pallas and N < PALLAS_MIN_ELEMS:
        return _repeat4_flat(_relu_sq_plus_sq(flat), N)

    # Lane-dense layout with minimal padding (< 128 extra elements).
    rows = pl.cdiv(N, LANE)
    pad = rows * LANE - N
    flat_p = jnp.pad(flat, (0, pad)) if pad else flat   # zero-copy when exact
    x2d = flat_p.reshape(rows, LANE)

    # Tile choice: up to 2 MiB, but keep >= MIN_GRID blocks when there is
    # enough data so both v7x TensorCores get work and pipelining overlaps.
    if rows <= 8:
        block_rows = rows                       # full-dim block (tiny input)
    else:
        block_rows = min(MAX_BLOCK_ROWS,
                         _round_up(pl.cdiv(rows, MIN_GRID), 8))
    grid = pl.cdiv(rows, block_rows)            # partial last block is masked

    val2d = pl.pallas_call(
        _relu_sq_plus_sq_kernel,
        out_shape=jax.ShapeDtypeStruct((rows, LANE), dtype),
        grid=(grid,),
        in_specs=[pl.BlockSpec((block_rows, LANE), lambda i: (i, 0))],
        out_specs=pl.BlockSpec((block_rows, LANE), lambda i: (i, 0)),
        compiler_params=pltpu.CompilerParams(
            dimension_semantics=("parallel",)),
    )(x2d)

    val = val2d.reshape(-1)[:N]
    return _repeat4_flat(val, N)


def _reference(x):
    v = jnp.maximum(x, 0.0)
    v = jnp.concatenate([v] * REPEATS, axis=1)
    return (v * v + x * x).reshape(-1)


if __name__ == "__main__":
    key = jax.random.PRNGKey(0)

    # Small shape consistent with the module's valid forward: (N, 1).
    x_small = jax.random.normal(key, (8, 1), dtype=jnp.float32)
    out_small = jax.block_until_ready(model_forward(x_small))
    assert out_small.shape == (x_small.shape[0] * REPEATS,)
    assert jnp.allclose(out_small, _reference(x_small), atol=1e-6, rtol=1e-6)

    # Pallas path, awkward N (not a multiple of 128): minimal pad, grid of 4
    # with a masked partial last block.
    x_big = jax.random.normal(jax.random.PRNGKey(1), (300_000, 1),
                              dtype=jnp.float32)
    out_big = jax.block_until_ready(model_forward(x_big, force_pallas=True))
    assert out_big.shape == (x_big.shape[0] * REPEATS,)
    assert jnp.allclose(out_big, _reference(x_big), atol=1e-6, rtol=1e-6)

    # Pallas path, 128-divisible N: zero-copy reshape (no pad pass), grid = 4.
    x_div = jax.random.normal(jax.random.PRNGKey(2), (4096 * 128, 1),
                              dtype=jnp.float32)
    out_div = jax.block_until_ready(model_forward(x_div, force_pallas=True))
    assert out_div.shape == (x_div.shape[0] * REPEATS,)
    assert jnp.allclose(out_div, _reference(x_div), atol=1e-6, rtol=1e-6)

    print("KERNEL_OK")
</pallas_src>

<mosaic_0001>
module attributes {stable_mosaic.version = 11 : i64} {
  func.func @_relu_sq_plus_sq_kernel(%arg0: i32, %arg1: memref<592x128xf32, #tpu.memory_space<vmem>>, %arg2: memref<592x128xf32, #tpu.memory_space<vmem>>) attributes {dimension_semantics = [#tpu.dimension_semantics<parallel>], iteration_bounds = array<i64: 4>, scalar_prefetch = 0 : i64, scratch_operands = 0 : i64, tpu.core_type = #tpu.core_type<tc>, window_params = [{transform_indices = @transform_0, window_bounds = array<i64: 592, 128>}, {transform_indices = @transform_1, window_bounds = array<i64: 592, 128>}]} {
    %c0 = arith.constant 0 : index
    %c0_0 = arith.constant 0 : index
    %0 = vector.load %arg1[%c0, %c0_0] : memref<592x128xf32, #tpu.memory_space<vmem>>, vector<592x128xf32>
    %1 = arith.mulf %0, %0 : vector<592x128xf32>
    %cst = arith.constant 0.000000e+00 : f32
    %2 = vector.broadcast %cst : f32 to vector<592x128xf32>
    %3 = arith.cmpf ogt, %0, %2 : vector<592x128xf32>
    %4 = arith.addf %1, %1 : vector<592x128xf32>
    %5 = arith.select %3, %4, %1 : vector<592x128xi1>, vector<592x128xf32>
    %c0_1 = arith.constant 0 : index
    %c0_2 = arith.constant 0 : index
    %6 = vector.load %arg2[%c0_1, %c0_2] : memref<592x128xf32, #tpu.memory_space<vmem>>, vector<592x128xf32>
    tpu.vector_store %arg2[%c0_1, %c0_2], %5 {strides = array<i32>} : memref<592x128xf32, #tpu.memory_space<vmem>>, vector<592x128xf32>,
    return
  }
  func.func @transform_0(%arg0: i32) -> (i32, i32) {
    %c0_i32 = arith.constant 0 : i32
    %c0_i32_0 = arith.constant 0 : i32
    return %arg0, %c0_i32 : i32, i32
  }
  func.func @transform_1(%arg0: i32) -> (i32, i32) {
    %c0_i32 = arith.constant 0 : i32
    %c0_i32_0 = arith.constant 0 : i32
    return %arg0, %c0_i32 : i32, i32
  }
}

</mosaic_0001>

<llo_original>
// kernel: tpu_custom_call.1
$region0: #{tpu_custom_call.1}
  #allocation0 [shape = 'u32[]', space=smem, size = 0x4, offset = 0x4, fixed_abs, tag = 'smem constant byte address 0x4 - core index']
  #allocation1 [shape = 'u32[144,128]{1,0:T(1,128)}', space=vmem, size = 0x12000, scoped, tag = 'internal scratch']
  %s0 = inlined_call_operand.hbm [shape: f32[2344,128], index: 0, kind: input, shape index: {}]
  %s1 = inlined_call_operand.hbm [shape: f32[2344,128], index: 1, kind: output, shape index: {}]
  %s2 = sld [smem:[#allocation0]]
  $region41: #{tpu_custom_call.1} parent=0
    _
  %s4 = ssub.s32 1, %s2
  %s5 = scalar_select 0, %s4, %s2
  $region1: #{tpu_custom_call.1} parent=0
    #allocation2 [shape = 'u8[606208]{0}', space=vmem, size = 0x94000, scoped, tag = 'input window, operand 0']
    #allocation3 [shape = 's32[2]{0}', space=sflag, size = 0x8, scoped, tag = 'scoped memory for tpu_custom_call.1']
    #allocation4 [shape = 's32[2]{0}', space=sflag, size = 0x8, scoped, tag = 'scoped memory for tpu_custom_call.1']
    #allocation5 [shape = 'u8[606208]{0}', space=vmem, size = 0x94000, scoped, tag = 'output window, operand 0']
    %6 = vsyncpa [#allocation3], 0
    %s7 = scalar_lea.sflag [#allocation3], 1
    %8 = vsyncpa %s7, 0
    %9 = vsyncpa [#allocation4], 0
    %s10 = scalar_lea.sflag [#allocation4], 1
    %11 = vsyncpa %s10, 0
    loop: start=0, step=1, limit=6
    $region2: #{tpu_custom_call.1} parent=1 // loop_pre_header
      _
    $region3: #{tpu_custom_call.1} parent=1 // loop_header
      %s13 = sphi 0, %s17
      %p14 = scmp.ge.s32.totalorder %s13, 6
      %s23 = sphi 0, %s25
      %s26 = sphi 0, %s23
      %s27 = sphi 0, %s26
      %s43 = sphi 0, %s27
      %s49 = sphi 0, %s51
      %s52 = sphi 0, %s49
      %s53 = sphi 0, %s52
      %s69 = sphi 0, %s53
    $region4: #{tpu_custom_call.1} parent=1 // loop_header_branch
      %16 = sbr.rel (%p14) target = $region8
    $region5: #{tpu_custom_call.1} parent=1 // loop_body
      %s18 = ssub.s32 %s13, 1
      %s19 = ssub.s32 %s13, 2
      %s20 = sadd.s32 %s13, 1
      %s21 = ssub.s32 %s13, %s20
      %p22 = scmp.eq.s32.totalorder %s21, 0
      %s24 = sadd.s32 %s23, 1
      %s25 = scalar_select %p22, %s23, %s24
      %p28 = pneg %p22
      %p29 = scmp.eq.s32.totalorder %s13, 3
      %p30 = por %p28, %p29
      %p31 = scmp.ne.s32.totalorder %s23, %s26
      %p32 = scmp.eq.s32.totalorder %s13, 0
      %p33 = por %p31, %p32
      %p34 = scmp.ne.s32.totalorder %s23, %s26
      %p35 = scmp.eq.s32.totalorder %s18, 3
      %p36 = por %p34, %p35
      %p37 = scmp.ne.s32.totalorder %s26, %s27
      %p38 = scmp.eq.s32.totalorder %s18, 0
      %p39 = por %p37, %p38
      %p40 = scmp.ne.s32.totalorder %s26, %s27
      %p41 = scmp.eq.s32.totalorder %s19, 3
      %p42 = por %p40, %p41
      %p44 = scmp.ne.s32.totalorder %s27, %s43
      %p45 = scmp.eq.s32.totalorder %s19, 0
      %p46 = por %p44, %p45
      %s47 = ssub.s32 %s13, %s20
      %p48 = scmp.eq.s32.totalorder %s47, 0
      %s50 = sadd.s32 %s49, 1
      %s51 = scalar_select %p48, %s49, %s50
      %p54 = pneg %p48
      %p55 = scmp.eq.s32.totalorder %s13, 3
      %p56 = por %p54, %p55
      %p57 = scmp.ne.s32.totalorder %s49, %s52
      %p58 = scmp.eq.s32.totalorder %s13, 0
      %p59 = por %p57, %p58
      %p60 = scmp.ne.s32.totalorder %s49, %s52
      %p61 = scmp.eq.s32.totalorder %s18, 3
      %p62 = por %p60, %p61
      %p63 = scmp.ne.s32.totalorder %s52, %s53
      %p64 = scmp.eq.s32.totalorder %s18, 0
      %p65 = por %p63, %p64
      %p66 = scmp.ne.s32.totalorder %s52, %s53
      %p67 = scmp.eq.s32.totalorder %s19, 3
      %p68 = por %p66, %p67
      %p70 = scmp.ne.s32.totalorder %s53, %s69
      %p71 = scmp.eq.s32.totalorder %s19, 0
      %p72 = por %p70, %p71
      %p73 = scmp.le.s32.totalorder 1, %s13
      %p74 = scmp.lt.s32.totalorder %s13, 5
      %p75 = pnand %p73, %p74
      %p76 = pneg %p75
      // Predicated region
      $region9: #{tpu_custom_call.1} parent=5 // pred_check
        _
      $region10: #{tpu_custom_call.1} parent=5 // pred_check_branch
        %78 = sbr.rel (%p75) target = $region12
      $region11: #{tpu_custom_call.1} parent=5 // pred_region
        %s79 = ssub.s32 %s13, 1
      $region12: #{tpu_custom_call.1} parent=5 // pred_fallthru
        _
      %p80 = scmp.lt.s32.totalorder %s13, 4
      // Predicated region
      $region13: #{tpu_custom_call.1} parent=5 // pred_check
        %p81 = pneg %p80
      $region14: #{tpu_custom_call.1} parent=5 // pred_check_branch
        %83 = sbr.rel (%p81) target = $region16
      $region15: #{tpu_custom_call.1} parent=5 // pred_region
        // Predicated region
        $region17: #{tpu_custom_call.1} parent=15 // pred_check
          %p84 = pneg %p33
        $region18: #{tpu_custom_call.1} parent=15 // pred_check_branch
          %86 = sbr.rel (%p84) target = $region20
        $region19: #{tpu_custom_call.1} parent=15 // pred_region
          %s87 = sand.u32 %s23, 1
          %s88 = scalar_lea.sflag [#allocation3], %s87
          %s89 = sand.u32 %s23, 1
          %s90 = smul.addr %s89, 592
          %s91 = scalar_lea.vmem [#allocation2], %s90
          %s92 = smul.u32 74, %s13
          %s93 = ssub.s32 293, %s92
          %p94 = scmp.lt.s32.totalorder %s93, 74
          %s95 = scalar_select %p94, %s93, 74
          %s96 = smul.u32 128, %s95
          %s98 = ssub.s32 9472, %s96
          %99 = vsyncadd %s88, %s98
          %p100 = scmp.ne.s32.totalorder 0, %s96
          %s101 = smul.addr %s92, 128
          %s102 = scalar_lea.hbm %s0, %s101
          %s103 = smul.u32 8, %s95
          %s104 = sshll.u32 %s91, 4
          %s105 = int_to_ptr.vmem [resolvable:$true] %s104
          %s106 = sshll.u32 %s103, 4
          %110 = dma.hbm_to_vmem [thread:$0]  (%p100), %s102, %s106, %s105, %s88, 128, 128, 8
        $region20: #{tpu_custom_call.1} parent=15 // pred_fallthru
          _
      $region16: #{tpu_custom_call.1} parent=5 // pred_fallthru
        _
      %p111 = scmp.le.s32.totalorder 1, %s13
      %p112 = scmp.lt.s32.totalorder %s13, 5
      %p113 = pnand %p111, %p112
      %p114 = pneg %p113
      // Predicated region
      $region21: #{tpu_custom_call.1} parent=5 // pred_check
        _
      $region22: #{tpu_custom_call.1} parent=5 // pred_check_branch
        %116 = sbr.rel (%p113) target = $region24
      $region23: #{tpu_custom_call.1} parent=5 // pred_region
        %s117 = ssub.s32 %s13, 1
        %s118 = sand.u32 %s26, 1
        %s119 = scalar_lea.sflag [#allocation3], %s118
        %s120 = sand.u32 %s26, 1
        %s121 = smul.addr %s120, 592
        %s122 = scalar_lea.vmem [#allocation2], %s121
        // Predicated region
        $region25: #{tpu_custom_call.1} parent=23 // pred_check
          %p123 = pneg %p39
        $region26: #{tpu_custom_call.1} parent=23 // pred_check_branch
          %125 = sbr.rel (%p123) target = $region28
        $region27: #{tpu_custom_call.1} parent=23 // pred_region
          %126 = dma.done %s119, 9472
        $region28: #{tpu_custom_call.1} parent=23 // pred_fallthru
          _
        %s127 = sand.u32 %s26, 1
        %s128 = scalar_lea.sflag [#allocation3], %s127
        %s129 = sand.u32 %s26, 1
        %s130 = smul.addr %s129, 592
        %s131 = scalar_lea.vmem [#allocation2], %s130
        %p132 = pneg %p39
        %p133 = pneg %p36
        %p134 = pneg %p65
        %p135 = pneg %p62
        %s136 = sand.u32 %s52, 1
        %s137 = scalar_lea.sflag [#allocation4], %s136
        %s138 = sand.u32 %s52, 1
        %s139 = smul.addr %s138, 592
        %s140 = scalar_lea.vmem [#allocation5], %s139
        %s141 = smul.u32 74, %s18
        %s142 = ssub.s32 293, %s141
        %p143 = scmp.lt.s32.totalorder %s142, 74
        %s144 = scalar_select %p143, %s142, 74
        %s145 = smul.u32 128, %s144
        %s146 = smul.u32 74, %s18
        %s147 = ssub.s32 293, %s146
        %p148 = scmp.lt.s32.totalorder %s147, 74
        %s149 = scalar_select %p148, %s147, 74
        %s150 = smul.u32 128, %s149
        %v151 = vld [vmem:[%s122] sm:$0xff]
        %v152 = vld [vmem:[%s122 + $0x8] sm:$0xff]
        %v153 = vld [vmem:[%s122 + $0x10] sm:$0xff]
        %v154 = vld [vmem:[%s122 + $0x18] sm:$0xff]
        %v155 = vld [vmem:[%s122 + $0x20] sm:$0xff]
        %v156 = vld [vmem:[%s122 + $0x28] sm:$0xff]
        %v157 = vld [vmem:[%s122 + $0x30] sm:$0xff]
        %v158 = vld [vmem:[%s122 + $0x38] sm:$0xff]
        %v159 = vld [vmem:[%s122 + $0x40] sm:$0xff]
        %v160 = vld [vmem:[%s122 + $0x48] sm:$0xff]
        %v161 = vld [vmem:[%s122 + $0x50] sm:$0xff]
        %v162 = vld [vmem:[%s122 + $0x58] sm:$0xff]
        %v163 = vld [vmem:[%s122 + $0x60] sm:$0xff]
        %v164 = vld [vmem:[%s122 + $0x68] sm:$0xff]
        %v165 = vld [vmem:[%s122 + $0x70] sm:$0xff]
        %v166 = vld [vmem:[%s122 + $0x78] sm:$0xff]
        %v167 = vld [vmem:[%s122 + $0x80] sm:$0xff]
        %v168 = vld [vmem:[%s122 + $0x88] sm:$0xff]
        %v169 = vld [vmem:[%s122 + $0x90] sm:$0xff]
        %v170 = vld [vmem:[%s122 + $0x98] sm:$0xff]
        %v171 = vld [vmem:[%s122 + $0xa0] sm:$0xff]
        %v172 = vld [vmem:[%s122 + $0xa8] sm:$0xff]
        %v173 = vld [vmem:[%s122 + $0xb0] sm:$0xff]
        %v174 = vld [vmem:[%s122 + $0xb8] sm:$0xff]
        %v175 = vld [vmem:[%s122 + $0xc0] sm:$0xff]
        %v176 = vld [vmem:[%s122 + $0xc8] sm:$0xff]
        %v177 = vld [vmem:[%s122 + $0xd0] sm:$0xff]
        %v178 = vld [vmem:[%s122 + $0xd8] sm:$0xff]
        %v179 = vld [vmem:[%s122 + $0xe0] sm:$0xff]
        %v180 = vld [vmem:[%s122 + $0xe8] sm:$0xff]
        %v181 = vld [vmem:[%s122 + $0xf0] sm:$0xff]
        %v182 = vld [vmem:[%s122 + $0xf8] sm:$0xff]
        %v183 = vld [vmem:[%s122 + $0x100] sm:$0xff]
        %v184 = vld [vmem:[%s122 + $0x108] sm:$0xff]
        %v185 = vld [vmem:[%s122 + $0x110] sm:$0xff]
        %v186 = vld [vmem:[%s122 + $0x118] sm:$0xff]
        %v187 = vld [vmem:[%s122 + $0x120] sm:$0xff]
        %v188 = vld [vmem:[%s122 + $0x128] sm:$0xff]
        %v189 = vld [vmem:[%s122 + $0x130] sm:$0xff]
        %v190 = vld [vmem:[%s122 + $0x138] sm:$0xff]
        %v191 = vld [vmem:[%s122 + $0x140] sm:$0xff]
        %v192 = vld [vmem:[%s122 + $0x148] sm:$0xff]
        %v193 = vld [vmem:[%s122 + $0x150] sm:$0xff]
        %v194 = vld [vmem:[%s122 + $0x158] sm:$0xff]
        %v195 = vld [vmem:[%s122 + $0x160] sm:$0xff]
        %v196 = vld [vmem:[%s122 + $0x168] sm:$0xff]
        %v197 = vld [vmem:[%s122 + $0x170] sm:$0xff]
        %v198 = vld [vmem:[%s122 + $0x178] sm:$0xff]
        %v199 = vld [vmem:[%s122 + $0x180] sm:$0xff]
        %v200 = vld [vmem:[%s122 + $0x188] sm:$0xff]
        %v201 = vld [vmem:[%s122 + $0x190] sm:$0xff]
        %v202 = vld [vmem:[%s122 + $0x198] sm:$0xff]
        %v203 = vld [vmem:[%s122 + $0x1a0] sm:$0xff]
        %v204 = vld [vmem:[%s122 + $0x1a8] sm:$0xff]
        %v205 = vld [vmem:[%s122 + $0x1b0] sm:$0xff]
        %v206 = vld [vmem:[%s122 + $0x1b8] sm:$0xff]
        %v207 = vld [vmem:[%s122 + $0x1c0] sm:$0xff]
        %v208 = vld [vmem:[%s122 + $0x1c8] sm:$0xff]
        %v209 = vld [vmem:[%s122 + $0x1d0] sm:$0xff]
        %v210 = vld [vmem:[%s122 + $0x1d8] sm:$0xff]
        %v211 = vld [vmem:[%s122 + $0x1e0] sm:$0xff]
        %v212 = vld [vmem:[%s122 + $0x1e8] sm:$0xff]
        %v213 = vld [vmem:[%s122 + $0x1f0] sm:$0xff]
        %v214 = vld [vmem:[%s122 + $0x1f8] sm:$0xff]
        %v215 = vld [vmem:[%s122 + $0x200] sm:$0xff]
        %v216 = vld [vmem:[%s122 + $0x208] sm:$0xff]
        %v217 = vld [vmem:[%s122 + $0x210] sm:$0xff]
        %v218 = vld [vmem:[%s122 + $0x218] sm:$0xff]
        %v219 = vld [vmem:[%s122 + $0x220] sm:$0xff]
        %v220 = vld [vmem:[%s122 + $0x228] sm:$0xff]
        %v221 = vld [vmem:[%s122 + $0x230] sm:$0xff]
        %v222 = vld [vmem:[%s122 + $0x238] sm:$0xff]
        %v223 = vld [vmem:[%s122 + $0x240] sm:$0xff]
        %v224 = vld [vmem:[%s122 + $0x248] sm:$0xff]
        %v225 = vmul.f32 %v151, %v151
        %v226 = vmul.f32 %v152, %v152
        %v227 = vmul.f32 %v153, %v153
        %v228 = vmul.f32 %v154, %v154
        %v229 = vmul.f32 %v155, %v155
        %v230 = vmul.f32 %v156, %v156
        %v231 = vmul.f32 %v157, %v157
        %v232 = vmul.f32 %v158, %v158
        %v233 = vmul.f32 %v159, %v159
        %v234 = vmul.f32 %v160, %v160
        %v235 = vmul.f32 %v161, %v161
        %v236 = vmul.f32 %v162, %v162
        %v237 = vmul.f32 %v163, %v163
        %v238 = vmul.f32 %v164, %v164
        %v239 = vmul.f32 %v165, %v165
        %v240 = vmul.f32 %v166, %v166
        %v241 = vmul.f32 %v167, %v167
        %v242 = vmul.f32 %v168, %v168
        %v243 = vmul.f32 %v169, %v169
        %v244 = vmul.f32 %v170, %v170
        %v245 = vmul.f32 %v171, %v171
        %v246 = vmul.f32 %v172, %v172
        %v247 = vmul.f32 %v173, %v173
        %v248 = vmul.f32 %v174, %v174
        %v249 = vmul.f32 %v175, %v175
        %v250 = vmul.f32 %v176, %v176
        %v251 = vmul.f32 %v177, %v177
        %v252 = vmul.f32 %v178, %v178
        %v253 = vmul.f32 %v179, %v179
        %v254 = vmul.f32 %v180, %v180
        %v255 = vmul.f32 %v181, %v181
        %v256 = vmul.f32 %v182, %v182
        %v257 = vmul.f32 %v183, %v183
        %v258 = vmul.f32 %v184, %v184
        %v259 = vmul.f32 %v185, %v185
        %v260 = vmul.f32 %v186, %v186
        %v261 = vmul.f32 %v187, %v187
        %v262 = vmul.f32 %v188, %v188
        %v263 = vmul.f32 %v189, %v189
        %v264 = vmul.f32 %v190, %v190
        %v265 = vmul.f32 %v191, %v191
        %v266 = vmul.f32 %v192, %v192
        %v267 = vmul.f32 %v193, %v193
        %v268 = vmul.f32 %v194, %v194
        %v269 = vmul.f32 %v195, %v195
        %v270 = vmul.f32 %v196, %v196
        %v271 = vmul.f32 %v197, %v197
        %v272 = vmul.f32 %v198, %v198
        %v273 = vmul.f32 %v199, %v199
        %v274 = vmul.f32 %v200, %v200
        %v275 = vmul.f32 %v201, %v201
        %v276 = vmul.f32 %v202, %v202
        %v277 = vmul.f32 %v203, %v203
        %v278 = vmul.f32 %v204, %v204
        %v279 = vmul.f32 %v205, %v205
        %v280 = vmul.f32 %v206, %v206
        %v281 = vmul.f32 %v207, %v207
        %v282 = vmul.f32 %v208, %v208
        %v283 = vmul.f32 %v209, %v209
        %v284 = vmul.f32 %v210, %v210
        %v285 = vmul.f32 %v211, %v211
        %v286 = vmul.f32 %v212, %v212
        %v287 = vmul.f32 %v213, %v213
        %v288 = vmul.f32 %v214, %v214
        %v289 = vmul.f32 %v215, %v215
        %v290 = vmul.f32 %v216, %v216
        %v291 = vmul.f32 %v217, %v217
        %v292 = vmul.f32 %v218, %v218
        %v293 = vmul.f32 %v219, %v219
        %v294 = vmul.f32 %v220, %v220
        %v295 = vmul.f32 %v221, %v221
        %v296 = vmul.f32 %v222, %v222
        %v297 = vmul.f32 %v223, %v223
        %v298 = vmul.f32 %v224, %v224
        %vm299 = vcmp.gt.f32.partialorder %v151, 0.0
        %vm300 = vcmp.gt.f32.partialorder %v152, 0.0
        %vm301 = vcmp.gt.f32.partialorder %v153, 0.0
        %vm302 = vcmp.gt.f32.partialorder %v154, 0.0
        %vm303 = vcmp.gt.f32.partialorder %v155, 0.0
        %vm304 = vcmp.gt.f32.partialorder %v156, 0.0
        %vm305 = vcmp.gt.f32.partialorder %v157, 0.0
        %vm306 = vcmp.gt.f32.partialorder %v158, 0.0
        %vm307 = vcmp.gt.f32.partialorder %v159, 0.0
        %vm308 = vcmp.gt.f32.partialorder %v160, 0.0
        %vm309 = vcmp.gt.f32.partialorder %v161, 0.0
        %vm310 = vcmp.gt.f32.partialorder %v162, 0.0
        %vm311 = vcmp.gt.f32.partialorder %v163, 0.0
        %vm312 = vcmp.gt.f32.partialorder %v164, 0.0
        %vm313 = vcmp.gt.f32.partialorder %v165, 0.0
        %vm314 = vcmp.gt.f32.partialorder %v166, 0.0
        %vm315 = vcmp.gt.f32.partialorder %v167, 0.0
        %vm316 = vcmp.gt.f32.partialorder %v168, 0.0
        %vm317 = vcmp.gt.f32.partialorder %v169, 0.0
        %vm318 = vcmp.gt.f32.partialorder %v170, 0.0
        %vm319 = vcmp.gt.f32.partialorder %v171, 0.0
        %vm320 = vcmp.gt.f32.partialorder %v172, 0.0
        %vm321 = vcmp.gt.f32.partialorder %v173, 0.0
        %vm322 = vcmp.gt.f32.partialorder %v174, 0.0
        %vm323 = vcmp.gt.f32.partialorder %v175, 0.0
        %vm324 = vcmp.gt.f32.partialorder %v176, 0.0
        %vm325 = vcmp.gt.f32.partialorder %v177, 0.0
        %vm326 = vcmp.gt.f32.partialorder %v178, 0.0
        %vm327 = vcmp.gt.f32.partialorder %v179, 0.0
        %vm328 = vcmp.gt.f32.partialorder %v180, 0.0
        %vm329 = vcmp.gt.f32.partialorder %v181, 0.0
        %vm330 = vcmp.gt.f32.partialorder %v182, 0.0
        %vm331 = vcmp.gt.f32.partialorder %v183, 0.0
        %vm332 = vcmp.gt.f32.partialorder %v184, 0.0
        %vm333 = vcmp.gt.f32.partialorder %v185, 0.0
        %vm334 = vcmp.gt.f32.partialorder %v186, 0.0
        %vm335 = vcmp.gt.f32.partialorder %v187, 0.0
        %vm336 = vcmp.gt.f32.partialorder %v188, 0.0
        %vm337 = vcmp.gt.f32.partialorder %v189, 0.0
        %vm338 = vcmp.gt.f32.partialorder %v190, 0.0
        %vm339 = vcmp.gt.f32.partialorder %v191, 0.0
        %vm340 = vcmp.gt.f32.partialorder %v192, 0.0
        %vm341 = vcmp.gt.f32.partialorder %v193, 0.0
        %vm342 = vcmp.gt.f32.partialorder %v194, 0.0
        %vm343 = vcmp.gt.f32.partialorder %v195, 0.0
        %vm344 = vcmp.gt.f32.partialorder %v196, 0.0
        %vm345 = vcmp.gt.f32.partialorder %v197, 0.0
        %vm346 = vcmp.gt.f32.partialorder %v198, 0.0
        %vm347 = vcmp.gt.f32.partialorder %v199, 0.0
        %vm348 = vcmp.gt.f32.partialorder %v200, 0.0
        %vm349 = vcmp.gt.f32.partialorder %v201, 0.0
        %vm350 = vcmp.gt.f32.partialorder %v202, 0.0
        %vm351 = vcmp.gt.f32.partialorder %v203, 0.0
        %vm352 = vcmp.gt.f32.partialorder %v204, 0.0
        %vm353 = vcmp.gt.f32.partialorder %v205, 0.0
        %vm354 = vcmp.gt.f32.partialorder %v206, 0.0
        %vm355 = vcmp.gt.f32.partialorder %v207, 0.0
        %vm356 = vcmp.gt.f32.partialorder %v208, 0.0
        %vm357 = vcmp.gt.f32.partialorder %v209, 0.0
        %vm358 = vcmp.gt.f32.partialorder %v210, 0.0
        %vm359 = vcmp.gt.f32.partialorder %v211, 0.0
        %vm360 = vcmp.gt.f32.partialorder %v212, 0.0
        %vm361 = vcmp.gt.f32.partialorder %v213, 0.0
        %vm362 = vcmp.gt.f32.partialorder %v214, 0.0
        %vm363 = vcmp.gt.f32.partialorder %v215, 0.0
        %vm364 = vcmp.gt.f32.partialorder %v216, 0.0
        %vm365 = vcmp.gt.f32.partialorder %v217, 0.0
        %vm366 = vcmp.gt.f32.partialorder %v218, 0.0
        %vm367 = vcmp.gt.f32.partialorder %v219, 0.0
        %vm368 = vcmp.gt.f32.partialorder %v220, 0.0
        %vm369 = vcmp.gt.f32.partialorder %v221, 0.0
        %vm370 = vcmp.gt.f32.partialorder %v222, 0.0
        %vm371 = vcmp.gt.f32.partialorder %v223, 0.0
        %vm372 = vcmp.gt.f32.partialorder %v224, 0.0
        %v373 = vadd.f32 %v225, %v225
        %v374 = vadd.f32 %v226, %v226
        %v375 = vadd.f32 %v227, %v227
        %v376 = vadd.f32 %v228, %v228
        %v377 = vadd.f32 %v229, %v229
        %v378 = vadd.f32 %v230, %v230
        %v379 = vadd.f32 %v231, %v231
        %v380 = vadd.f32 %v232, %v232
        %v381 = vadd.f32 %v233, %v233
        %v382 = vadd.f32 %v234, %v234
        %v383 = vadd.f32 %v235, %v235
        %v384 = vadd.f32 %v236, %v236
        %v385 = vadd.f32 %v237, %v237
        %v386 = vadd.f32 %v238, %v238
        %v387 = vadd.f32 %v239, %v239
        %v388 = vadd.f32 %v240, %v240
        %v389 = vadd.f32 %v241, %v241
        %v390 = vadd.f32 %v242, %v242
        %v391 = vadd.f32 %v243, %v243
        %v392 = vadd.f32 %v244, %v244
        %v393 = vadd.f32 %v245, %v245
        %v394 = vadd.f32 %v246, %v246
        %v395 = vadd.f32 %v247, %v247
        %v396 = vadd.f32 %v248, %v248
        %v397 = vadd.f32 %v249, %v249
        %v398 = vadd.f32 %v250, %v250
        %v399 = vadd.f32 %v251, %v251
        %v400 = vadd.f32 %v252, %v252
        %v401 = vadd.f32 %v253, %v253
        %v402 = vadd.f32 %v254, %v254
        %v403 = vadd.f32 %v255, %v255
        %v404 = vadd.f32 %v256, %v256
        %v405 = vadd.f32 %v257, %v257
        %v406 = vadd.f32 %v258, %v258
        %v407 = vadd.f32 %v259, %v259
        %v408 = vadd.f32 %v260, %v260
        %v409 = vadd.f32 %v261, %v261
        %v410 = vadd.f32 %v262, %v262
        %v411 = vadd.f32 %v263, %v263
        %v412 = vadd.f32 %v264, %v264
        %v413 = vadd.f32 %v265, %v265
        %v414 = vadd.f32 %v266, %v266
        %v415 = vadd.f32 %v267, %v267
        %v416 = vadd.f32 %v268, %v268
        %v417 = vadd.f32 %v269, %v269
        %v418 = vadd.f32 %v270, %v270
        %v419 = vadd.f32 %v271, %v271
        %v420 = vadd.f32 %v272, %v272
        %v421 = vadd.f32 %v273, %v273
        %v422 = vadd.f32 %v274, %v274
        %v423 = vadd.f32 %v275, %v275
        %v424 = vadd.f32 %v276, %v276
        %v425 = vadd.f32 %v277, %v277
        %v426 = vadd.f32 %v278, %v278
        %v427 = vadd.f32 %v279, %v279
        %v428 = vadd.f32 %v280, %v280
        %v429 = vadd.f32 %v281, %v281
        %v430 = vadd.f32 %v282, %v282
        %v431 = vadd.f32 %v283, %v283
        %v432 = vadd.f32 %v284, %v284
        %v433 = vadd.f32 %v285, %v285
        %v434 = vadd.f32 %v286, %v286
        %v435 = vadd.f32 %v287, %v287
        %v436 = vadd.f32 %v288, %v288
        %v437 = vadd.f32 %v289, %v289
        %v438 = vadd.f32 %v290, %v290
        %v439 = vadd.f32 %v291, %v291
        %v440 = vadd.f32 %v292, %v292
        %v441 = vadd.f32 %v293, %v293
        %v442 = vadd.f32 %v294, %v294
        %v443 = vadd.f32 %v295, %v295
        %v444 = vadd.f32 %v296, %v296
        %v445 = vadd.f32 %v297, %v297
        %v446 = vadd.f32 %v298, %v298
        %v447 = vsel %vm299, %v373, %v225
        %v448 = vsel %vm300, %v374, %v226
        %v449 = vsel %vm301, %v375, %v227
        %v450 = vsel %vm302, %v376, %v228
        %v451 = vsel %vm303, %v377, %v229
        %v452 = vsel %vm304, %v378, %v230
        %v453 = vsel %vm305, %v379, %v231
        %v454 = vsel %vm306, %v380, %v232
        %v455 = vsel %vm307, %v381, %v233
        %v456 = vsel %vm308, %v382, %v234
        %v457 = vsel %vm309, %v383, %v235
        %v458 = vsel %vm310, %v384, %v236
        %v459 = vsel %vm311, %v385, %v237
        %v460 = vsel %vm312, %v386, %v238
        %v461 = vsel %vm313, %v387, %v239
        %v462 = vsel %vm314, %v388, %v240
        %v463 = vsel %vm315, %v389, %v241
        %v464 = vsel %vm316, %v390, %v242
        %v465 = vsel %vm317, %v391, %v243
        %v466 = vsel %vm318, %v392, %v244
        %v467 = vsel %vm319, %v393, %v245
        %v468 = vsel %vm320, %v394, %v246
        %v469 = vsel %vm321, %v395, %v247
        %v470 = vsel %vm322, %v396, %v248
        %v471 = vsel %vm323, %v397, %v249
        %v472 = vsel %vm324, %v398, %v250
        %v473 = vsel %vm325, %v399, %v251
        %v474 = vsel %vm326, %v400, %v252
        %v475 = vsel %vm327, %v401, %v253
        %v476 = vsel %vm328, %v402, %v254
        %v477 = vsel %vm329, %v403, %v255
        %v478 = vsel %vm330, %v404, %v256
        %v479 = vsel %vm331, %v405, %v257
        %v480 = vsel %vm332, %v406, %v258
        %v481 = vsel %vm333, %v407, %v259
        %v482 = vsel %vm334, %v408, %v260
        %v483 = vsel %vm335, %v409, %v261
        %v484 = vsel %vm336, %v410, %v262
        %v485 = vsel %vm337, %v411, %v263
        %v486 = vsel %vm338, %v412, %v264
        %v487 = vsel %vm339, %v413, %v265
        %v488 = vsel %vm340, %v414, %v266
        %v489 = vsel %vm341, %v415, %v267
        %v490 = vsel %vm342, %v416, %v268
        %v491 = vsel %vm343, %v417, %v269
        %v492 = vsel %vm344, %v418, %v270
        %v493 = vsel %vm345, %v419, %v271
        %v494 = vsel %vm346, %v420, %v272
        %v495 = vsel %vm347, %v421, %v273
        %v496 = vsel %vm348, %v422, %v274
        %v497 = vsel %vm349, %v423, %v275
        %v498 = vsel %vm350, %v424, %v276
        %v499 = vsel %vm351, %v425, %v277
        %v500 = vsel %vm352, %v426, %v278
        %v501 = vsel %vm353, %v427, %v279
        %v502 = vsel %vm354, %v428, %v280
        %v503 = vsel %vm355, %v429, %v281
        %v504 = vsel %vm356, %v430, %v282
        %v505 = vsel %vm357, %v431, %v283
        %v506 = vsel %vm358, %v432, %v284
        %v507 = vsel %vm359, %v433, %v285
        %v508 = vsel %vm360, %v434, %v286
        %v509 = vsel %vm361, %v435, %v287
        %v510 = vsel %vm362, %v436, %v288
        %v511 = vsel %vm363, %v437, %v289
        %v512 = vsel %vm364, %v438, %v290
        %v513 = vsel %vm365, %v439, %v291
        %v514 = vsel %vm366, %v440, %v292
        %v515 = vsel %vm367, %v441, %v293
        %v516 = vsel %vm368, %v442, %v294
        %v517 = vsel %vm369, %v443, %v295
        %v518 = vsel %vm370, %v444, %v296
        %v519 = vsel %vm371, %v445, %v297
        %v520 = vsel %vm372, %v446, %v298
        %521 = vst [vmem:[%s140] sm:$0xff] %v447
        %522 = vst [vmem:[%s140 + $0x8] sm:$0xff] %v448
        %523 = vst [vmem:[%s140 + $0x10] sm:$0xff] %v449
        %524 = vst [vmem:[%s140 + $0x18] sm:$0xff] %v450
        %525 = vst [vmem:[%s140 + $0x20] sm:$0xff] %v451
        %526 = vst [vmem:[%s140 + $0x28] sm:$0xff] %v452
        %527 = vst [vmem:[%s140 + $0x30] sm:$0xff] %v453
        %528 = vst [vmem:[%s140 + $0x38] sm:$0xff] %v454
        %529 = vst [vmem:[%s140 + $0x40] sm:$0xff] %v455
        %530 = vst [vmem:[%s140 + $0x48] sm:$0xff] %v456
        %531 = vst [vmem:[%s140 + $0x50] sm:$0xff] %v457
        %532 = vst [vmem:[%s140 + $0x58] sm:$0xff] %v458
        %533 = vst [vmem:[%s140 + $0x60] sm:$0xff] %v459
        %534 = vst [vmem:[%s140 + $0x68] sm:$0xff] %v460
        %535 = vst [vmem:[%s140 + $0x70] sm:$0xff] %v461
        %536 = vst [vmem:[%s140 + $0x78] sm:$0xff] %v462
        %537 = vst [vmem:[%s140 + $0x80] sm:$0xff] %v463
        %538 = vst [vmem:[%s140 + $0x88] sm:$0xff] %v464
        %539 = vst [vmem:[%s140 + $0x90] sm:$0xff] %v465
        %540 = vst [vmem:[%s140 + $0x98] sm:$0xff] %v466
        %541 = vst [vmem:[%s140 + $0xa0] sm:$0xff] %v467
        %542 = vst [vmem:[%s140 + $0xa8] sm:$0xff] %v468
        %543 = vst [vmem:[%s140 + $0xb0] sm:$0xff] %v469
        %544 = vst [vmem:[%s140 + $0xb8] sm:$0xff] %v470
        %545 = vst [vmem:[%s140 + $0xc0] sm:$0xff] %v471
        %546 = vst [vmem:[%s140 + $0xc8] sm:$0xff] %v472
        %547 = vst [vmem:[%s140 + $0xd0] sm:$0xff] %v473
        %548 = vst [vmem:[%s140 + $0xd8] sm:$0xff] %v474
        %549 = vst [vmem:[%s140 + $0xe0] sm:$0xff] %v475
        %550 = vst [vmem:[%s140 + $0xe8] sm:$0xff] %v476
        %551 = vst [vmem:[%s140 + $0xf0] sm:$0xff] %v477
        %552 = vst [vmem:[%s140 + $0xf8] sm:$0xff] %v478
        %553 = vst [vmem:[%s140 + $0x100] sm:$0xff] %v479
        %554 = vst [vmem:[%s140 + $0x108] sm:$0xff] %v480
        %555 = vst [vmem:[%s140 + $0x110] sm:$0xff] %v481
        %556 = vst [vmem:[%s140 + $0x118] sm:$0xff] %v482
        %557 = vst [vmem:[%s140 + $0x120] sm:$0xff] %v483
        %558 = vst [vmem:[%s140 + $0x128] sm:$0xff] %v484
        %559 = vst [vmem:[%s140 + $0x130] sm:$0xff] %v485
        %560 = vst [vmem:[%s140 + $0x138] sm:$0xff] %v486
        %561 = vst [vmem:[%s140 + $0x140] sm:$0xff] %v487
        %562 = vst [vmem:[%s140 + $0x148] sm:$0xff] %v488
        %563 = vst [vmem:[%s140 + $0x150] sm:$0xff] %v489
        %564 = vst [vmem:[%s140 + $0x158] sm:$0xff] %v490
        %565 = vst [vmem:[%s140 + $0x160] sm:$0xff] %v491
        %566 = vst [vmem:[%s140 + $0x168] sm:$0xff] %v492
        %567 = vst [vmem:[%s140 + $0x170] sm:$0xff] %v493
        %568 = vst [vmem:[%s140 + $0x178] sm:$0xff] %v494
        %569 = vst [vmem:[%s140 + $0x180] sm:$0xff] %v495
        %570 = vst [vmem:[%s140 + $0x188] sm:$0xff] %v496
        %571 = vst [vmem:[%s140 + $0x190] sm:$0xff] %v497
        %572 = vst [vmem:[%s140 + $0x198] sm:$0xff] %v498
        %573 = vst [vmem:[%s140 + $0x1a0] sm:$0xff] %v499
        %574 = vst [vmem:[%s140 + $0x1a8] sm:$0xff] %v500
        %575 = vst [vmem:[%s140 + $0x1b0] sm:$0xff] %v501
        %576 = vst [vmem:[%s140 + $0x1b8] sm:$0xff] %v502
        %577 = vst [vmem:[%s140 + $0x1c0] sm:$0xff] %v503
        %578 = vst [vmem:[%s140 + $0x1c8] sm:$0xff] %v504
        %579 = vst [vmem:[%s140 + $0x1d0] sm:$0xff] %v505
        %580 = vst [vmem:[%s140 + $0x1d8] sm:$0xff] %v506
        %581 = vst [vmem:[%s140 + $0x1e0] sm:$0xff] %v507
        %582 = vst [vmem:[%s140 + $0x1e8] sm:$0xff] %v508
        %583 = vst [vmem:[%s140 + $0x1f0] sm:$0xff] %v509
        %584 = vst [vmem:[%s140 + $0x1f8] sm:$0xff] %v510
        %585 = vst [vmem:[%s140 + $0x200] sm:$0xff] %v511
        %586 = vst [vmem:[%s140 + $0x208] sm:$0xff] %v512
        %587 = vst [vmem:[%s140 + $0x210] sm:$0xff] %v513
        %588 = vst [vmem:[%s140 + $0x218] sm:$0xff] %v514
        %589 = vst [vmem:[%s140 + $0x220] sm:$0xff] %v515
        %590 = vst [vmem:[%s140 + $0x228] sm:$0xff] %v516
        %591 = vst [vmem:[%s140 + $0x230] sm:$0xff] %v517
        %592 = vst [vmem:[%s140 + $0x238] sm:$0xff] %v518
        %593 = vst [vmem:[%s140 + $0x240] sm:$0xff] %v519
        %594 = vst [vmem:[%s140 + $0x248] sm:$0xff] %v520
        %s595 = sand.u32 %s52, 1
        %s596 = scalar_lea.sflag [#allocation4], %s595
        %s597 = sand.u32 %s52, 1
        %s598 = smul.addr %s597, 592
        %s599 = scalar_lea.vmem [#allocation5], %s598
        // Predicated region
        $region29: #{tpu_custom_call.1} parent=23 // pred_check
          %p600 = pneg %p62
        $region30: #{tpu_custom_call.1} parent=23 // pred_check_branch
          %602 = sbr.rel (%p600) target = $region32
        $region31: #{tpu_custom_call.1} parent=23 // pred_region
          %s603 = smul.u32 74, %s18
          %s604 = ssub.s32 293, %s603
          %p605 = scmp.lt.s32.totalorder %s604, 74
          %s606 = scalar_select %p605, %s604, 74
          %s607 = smul.u32 128, %s606
          %s609 = ssub.s32 9472, %s607
          %610 = vsyncadd %s596, %s609
          %p611 = scmp.ne.s32.totalorder 0, %s607
          %s612 = smul.addr %s603, 128
          %s613 = scalar_lea.hbm %s1, %s612
          %s614 = smul.u32 8, %s606
          %s615 = sshll.u32 %s599, 4
          %s616 = int_to_ptr.vmem [resolvable:$true] %s615
          %s617 = sshll.u32 %s614, 4
          %621 = dma.vmem_to_hbm [thread:$0]  (%p611), %s616, %s617, %s613, %s596, 128, 128, 8
        $region32: #{tpu_custom_call.1} parent=23 // pred_fallthru
          _
      $region24: #{tpu_custom_call.1} parent=5 // pred_fallthru
        _
      %p622 = scmp.le.s32.totalorder 2, %s13
      // Predicated region
      $region33: #{tpu_custom_call.1} parent=5 // pred_check
        %p623 = pneg %p622
      $region34: #{tpu_custom_call.1} parent=5 // pred_check_branch
        %625 = sbr.rel (%p623) target = $region36
      $region35: #{tpu_custom_call.1} parent=5 // pred_region
        %s626 = ssub.s32 %s13, 2
        // Predicated region
        $region37: #{tpu_custom_call.1} parent=35 // pred_check
          %p627 = pneg %p68
        $region38: #{tpu_custom_call.1} parent=35 // pred_check_branch
          %629 = sbr.rel (%p627) target = $region40
        $region39: #{tpu_custom_call.1} parent=35 // pred_region
          %s630 = sand.u32 %s53, 1
          %s631 = scalar_lea.sflag [#allocation4], %s630
          %s632 = sand.u32 %s53, 1
          %s633 = smul.addr %s632, 592
          %s634 = scalar_lea.vmem [#allocation5], %s633
          %635 = dma.done %s631, 9472
        $region40: #{tpu_custom_call.1} parent=35 // pred_fallthru
          _
      $region36: #{tpu_custom_call.1} parent=5 // pred_fallthru
        _
    $region6: #{tpu_custom_call.1} parent=1 // loop_footer
      %s17 = sadd.s32 1, %s13
    $region7: #{tpu_custom_call.1} parent=1 // loop_footer_branch
      %12 = sbr.rel target = $region3
    $region8: #{tpu_custom_call.1} parent=1 // loop_exit
      _
    %636 = vsyncpa [#allocation3], 1
    %s637 = scalar_lea.sflag [#allocation3], 1
    %638 = vsyncpa %s637, 1
    %639 = vsyncpa [#allocation4], 1
    %s640 = scalar_lea.sflag [#allocation4], 1
    %641 = vsyncpa %s640, 1

</llo_original>
